<compile_context>
chip_gen: v5e
topology: v5e:2x2
jax: 0.10.0
libtpu: 0.0.40
codegen_flags: <defaults>
</compile_context>

<pallas_src>
import jax
import jax.numpy as jnp
from jax.experimental import pallas as pl
from jax.experimental.pallas import tpu as pltpu

_LANE = 128


def _frozen_bn_kernel(x_ref, sb_ref, o_ref):
    # x_ref: (block_rows, block_cols); sb_ref: (block_rows, 2) f32 [scale|bias]
    x = x_ref[...].astype(jnp.float32)
    scale = sb_ref[:, 0:1]
    bias = sb_ref[:, 1:2]
    o_ref[...] = (x * scale + bias).astype(o_ref.dtype)


def _tpu_config():
    """Per-generation tile budget / VMEM limit / pipelining knobs."""
    kind = ""
    try:
        kind = jax.devices()[0].device_kind.lower()
    except Exception:  # pragma: no cover - conservative defaults
        pass
    # Conservative defaults: safe on every TPU generation.
    cfg = dict(block_budget=4 << 20, vmem_limit=32 << 20, min_blocks=1, buffers=2)
    if "v6" in kind:
        # v6e: 128 MiB physical VMEM, 1 TC -> bigger tiles, fewer grid steps.
        cfg.update(block_budget=6 << 20, vmem_limit=64 << 20)
    elif ("v7" in kind) or ("tpu7" in kind) or ("7x" in kind):
        # v7x: only 64 MiB physical VMEM per TC, but 2 TCs and 3.2 TB/s HBM.
        cfg.update(block_budget=4 << 20, vmem_limit=48 << 20,
                   min_blocks=4, buffers=3)
    elif "v5" in kind:
        # v5e: DMA time per 4 MiB block already dwarfs fixed overhead.
        cfg.update(block_budget=4 << 20, vmem_limit=32 << 20)
    return cfg


def _pick_block(rows, cols, itemsize, budget):
    """Pick (block_rows, block_cols, sublane) targeting `budget` bytes per x block."""
    sublane = {4: 8, 2: 16, 1: 32}.get(itemsize, 8)

    # Lane axis: prefer the full extent (always a legal block dim); only split
    # into 128-multiples when one sublane-group already blows the budget.
    if cols > _LANE and cols * itemsize * sublane > budget:
        block_cols = max(_LANE, (budget // (itemsize * sublane)) // _LANE * _LANE)
    else:
        block_cols = cols

    # Row axis: fill the remaining budget with a sublane-multiple row count.
    block_rows = max(
        sublane, (budget // max(block_cols * itemsize, 1)) // sublane * sublane
    )
    rows_rounded = ((rows + sublane - 1) // sublane) * sublane
    block_rows = min(block_rows, rows_rounded)
    return block_rows, block_cols, sublane


def _ensure_min_blocks(rows, cols, block_rows, block_cols, sublane, min_blocks):
    """Split blocks until the grid has >= min_blocks entries (v7x: 2 TCs)."""
    def nblocks(br, bc):
        return (-(-rows // br)) * (-(-cols // bc))

    while nblocks(block_rows, block_cols) < min_blocks:
        can_split_rows = block_rows >= 2 * sublane
        can_split_cols = block_cols >= 2 * _LANE
        if not (can_split_rows or can_split_cols):
            break
        # Prefer splitting whichever block axis is "larger" in vregs.
        rows_bigger = (block_rows // sublane) >= (block_cols // _LANE)
        if can_split_rows and (rows_bigger or not can_split_cols):
            block_rows = max(sublane, (block_rows // 2) // sublane * sublane)
        else:
            block_cols = max(_LANE, (block_cols // 2) // _LANE * _LANE)
    return block_rows, block_cols


def _x_block_spec(block_shape, index_map, buffers):
    if buffers > 2:
        try:
            return pl.BlockSpec(block_shape, index_map,
                                pipeline_mode=pl.Buffered(buffers))
        except TypeError:  # older jax without pipeline_mode: fall back
            pass
    return pl.BlockSpec(block_shape, index_map)


def frozen_batch_norm_2d(x, weight, bias, running_mean, running_var, eps=1e-5):
    """x: (N, C, H, W); params: (C,). Returns (N, C, H, W) in x.dtype."""
    n, c, h, w = x.shape
    rows, cols = n * c, h * w

    # Per-channel affine in f32 (tiny: C elements).
    w32 = weight.astype(jnp.float32)
    b32 = bias.astype(jnp.float32)
    rm32 = running_mean.astype(jnp.float32)
    rv32 = running_var.astype(jnp.float32)
    scale_c = w32 * jax.lax.rsqrt(rv32 + jnp.float32(eps))  # (C,)
    bias_c = b32 - rm32 * scale_c                           # (C,)

    # Lane-starved case (H*W < 128): every vst would be masked with <=50% lane
    # utilization and the pallas_call fixed cost dominates -> let XLA fuse the
    # plain broadcast expression instead.  (No bytes-based threshold here so
    # the Pallas path stays exercised at demo scale.)
    if cols < _LANE:
        y = (x.astype(jnp.float32)
             * scale_c.reshape(1, c, 1, 1)
             + bias_c.reshape(1, c, 1, 1))
        return y.astype(x.dtype)

    # Fused per-row [scale | bias] operand: (N*C, 2) f32 (tiny side stream).
    sb_rows = jnp.stack([jnp.tile(scale_c, n), jnp.tile(bias_c, n)], axis=1)

    # Native layout: pure reshape (no data movement), H*W on the lane axis.
    x2d = x.reshape(rows, cols)

    itemsize = jnp.dtype(x.dtype).itemsize
    cfg = _tpu_config()
    block_rows, block_cols, sublane = _pick_block(
        rows, cols, itemsize, cfg["block_budget"])
    block_rows, block_cols = _ensure_min_blocks(
        rows, cols, block_rows, block_cols, sublane, cfg["min_blocks"])
    grid = (pl.cdiv(rows, block_rows), pl.cdiv(cols, block_cols))

    out2d = pl.pallas_call(
        _frozen_bn_kernel,
        out_shape=jax.ShapeDtypeStruct((rows, cols), x.dtype),
        grid=grid,
        in_specs=[
            _x_block_spec((block_rows, block_cols), lambda i, j: (i, j),
                          cfg["buffers"]),                         # x
            pl.BlockSpec((block_rows, 2), lambda i, j: (i, 0)),    # [scale|bias]
        ],
        out_specs=pl.BlockSpec((block_rows, block_cols), lambda i, j: (i, j)),
        compiler_params=pltpu.CompilerParams(
            dimension_semantics=("parallel", "parallel"),
            vmem_limit_bytes=cfg["vmem_limit"],
        ),
        cost_estimate=pl.CostEstimate(
            flops=2 * rows * cols,
            transcendentals=0,
            bytes_accessed=2 * rows * cols * itemsize + sb_rows.size * 4,
        ),
    )(x2d, sb_rows)

    # Pure reshape back to NCHW (no transpose).
    return out2d.reshape(n, c, h, w)


def _reference(x, weight, bias, running_mean, running_var, eps):
    scale = weight.reshape(1, -1, 1, 1) * jax.lax.rsqrt(
        running_var.reshape(1, -1, 1, 1) + eps
    )
    b = bias.reshape(1, -1, 1, 1) - running_mean.reshape(1, -1, 1, 1) * scale
    return x * scale + b


if __name__ == "__main__":
    key = jax.random.PRNGKey(0)
    n, c, h, w = 2, 4, 16, 16
    eps = 1e-5

    k_x, k_w, k_b, k_rm, k_rv = jax.random.split(key, 5)
    x = jax.random.normal(k_x, (n, c, h, w), dtype=jnp.float32)
    weight = 1.0 + 0.1 * jax.random.normal(k_w, (c,), dtype=jnp.float32)
    bias = 0.1 * jax.random.normal(k_b, (c,), dtype=jnp.float32)
    running_mean = 0.5 * jax.random.normal(k_rm, (c,), dtype=jnp.float32)
    running_var = jnp.abs(1.0 + 0.2 * jax.random.normal(k_rv, (c,), dtype=jnp.float32))

    # Main case: H*W = 256 >= 128 -> Pallas path.
    y = frozen_batch_norm_2d(x, weight, bias, running_mean, running_var, eps)
    y = jax.block_until_ready(y)
    y_ref = _reference(x, weight, bias, running_mean, running_var, eps)
    assert y.shape == x.shape and y.dtype == x.dtype
    assert jnp.allclose(y, y_ref, atol=1e-5, rtol=1e-5)

    # Ragged Pallas case: rows=3 (not a sublane multiple), cols=143 (not 128k).
    n2, c2, h2, w2 = 1, 3, 11, 13
    x2 = jax.random.normal(jax.random.PRNGKey(1), (n2, c2, h2, w2), dtype=jnp.float32)
    w2p = jnp.linspace(0.5, 1.5, c2, dtype=jnp.float32)
    b2p = jnp.linspace(-0.2, 0.2, c2, dtype=jnp.float32)
    rm2 = jnp.linspace(-0.3, 0.3, c2, dtype=jnp.float32)
    rv2 = jnp.linspace(0.8, 1.2, c2, dtype=jnp.float32)
    y2 = jax.block_until_ready(frozen_batch_norm_2d(x2, w2p, b2p, rm2, rv2, eps))
    assert jnp.allclose(y2, _reference(x2, w2p, b2p, rm2, rv2, eps),
                        atol=1e-5, rtol=1e-5)

    # Lane-starved case (H*W = 63 < 128): plain-JAX fused fallback.
    n3, c3, h3, w3 = 1, 3, 7, 9
    x3 = jax.random.normal(jax.random.PRNGKey(2), (n3, c3, h3, w3), dtype=jnp.float32)
    y3 = jax.block_until_ready(frozen_batch_norm_2d(x3, w2p, b2p, rm2, rv2, eps))
    assert jnp.allclose(y3, _reference(x3, w2p, b2p, rm2, rv2, eps),
                        atol=1e-5, rtol=1e-5)

    print("KERNEL_OK")
</pallas_src>

<mosaic_0001>
module attributes {stable_mosaic.version = 11 : i64} {
  func.func @_frozen_bn_kernel(%arg0: i32, %arg1: i32, %arg2: memref<8x256xf32, #tpu.memory_space<vmem>>, %arg3: memref<8x2xf32, #tpu.memory_space<vmem>>, %arg4: memref<8x256xf32, #tpu.memory_space<vmem>>) attributes {dimension_semantics = [#tpu.dimension_semantics<parallel>, #tpu.dimension_semantics<parallel>], iteration_bounds = array<i64: 1, 1>, scalar_prefetch = 0 : i64, scratch_operands = 0 : i64, tpu.core_type = #tpu.core_type<tc>, window_params = [{transform_indices = @transform_0, window_bounds = array<i64: 8, 256>}, {transform_indices = @transform_1, window_bounds = array<i64: 8, 2>}, {transform_indices = @transform_2, window_bounds = array<i64: 8, 256>}]} {
    %c0 = arith.constant 0 : index
    %c0_0 = arith.constant 0 : index
    %0 = vector.load %arg2[%c0, %c0_0] : memref<8x256xf32, #tpu.memory_space<vmem>>, vector<8x256xf32>
    %c0_1 = arith.constant 0 : index
    %c0_2 = arith.constant 0 : index
    %1 = vector.load %arg3[%c0_1, %c0_2] : memref<8x2xf32, #tpu.memory_space<vmem>>, vector<8x1xf32>
    %c0_3 = arith.constant 0 : index
    %c1 = arith.constant 1 : index
    %2 = vector.load %arg3[%c0_3, %c1] : memref<8x2xf32, #tpu.memory_space<vmem>>, vector<8x1xf32>
    %3 = vector.broadcast %1 : vector<8x1xf32> to vector<8x256xf32>
    %4 = arith.mulf %0, %3 : vector<8x256xf32>
    %5 = vector.broadcast %2 : vector<8x1xf32> to vector<8x256xf32>
    %6 = arith.addf %4, %5 : vector<8x256xf32>
    %c0_4 = arith.constant 0 : index
    %c0_5 = arith.constant 0 : index
    %7 = vector.load %arg4[%c0_4, %c0_5] : memref<8x256xf32, #tpu.memory_space<vmem>>, vector<8x256xf32>
    tpu.vector_store %arg4[%c0_4, %c0_5], %6 {strides = array<i32>} : memref<8x256xf32, #tpu.memory_space<vmem>>, vector<8x256xf32>,
    return
  }
  func.func @transform_0(%arg0: i32, %arg1: i32) -> (i32, i32) {
    %c0_i32 = arith.constant 0 : i32
    return %arg0, %arg1 : i32, i32
  }
  func.func @transform_1(%arg0: i32, %arg1: i32) -> (i32, i32) {
    %c0_i32 = arith.constant 0 : i32
    %c0_i32_0 = arith.constant 0 : i32
    return %arg0, %c0_i32 : i32, i32
  }
  func.func @transform_2(%arg0: i32, %arg1: i32) -> (i32, i32) {
    %c0_i32 = arith.constant 0 : i32
    return %arg0, %arg1 : i32, i32
  }
}

</mosaic_0001>

<llo_original>
// kernel: tpu_custom_call.1
$region0: #{tpu_custom_call.1}
  #allocation0 [shape = 'u32[]', space=smem, size = 0x4, offset = 0x4, fixed_abs, tag = 'smem constant byte address 0x4 - core index']
  #allocation1 [shape = 'u32[72,128]{1,0:T(1,128)}', space=vmem, size = 0x9000, scoped, tag = 'internal scratch']
  %s0 = inlined_call_operand.hbm [shape: f32[8,256], index: 0, kind: input, shape index: {}]
  %s1 = inlined_call_operand.vmem [shape: f32[8,2], index: 1, kind: input, shape index: {}]
  %s2 = inlined_call_operand.hbm [shape: f32[8,256], index: 2, kind: output, shape index: {}]
  %s3 = sld [smem:[#allocation0]]
  $region22: #{tpu_custom_call.1} parent=0
    _
  %s5 = ssub.s32 1, %s3
  %s6 = scalar_select 0, %s5, %s3
  $region1: #{tpu_custom_call.1} parent=0
    #allocation2 [shape = 'u8[8192]{0}', space=vmem, size = 0x2000, scoped, tag = 'input window, operand 0, single buffered']
    #allocation3 [shape = 's32[1]{0}', space=sflag, size = 0x4, scoped, tag = 'scoped memory for tpu_custom_call.1']
    #allocation4 [shape = 's32[1]{0}', space=sflag, size = 0x4, scoped, tag = 'scoped memory for tpu_custom_call.1']
    #allocation5 [shape = 'u8[8192]{0}', space=vmem, size = 0x2000, scoped, tag = 'output window, operand 0, single buffered']
    %7 = vsyncpa [#allocation3], 0
    %8 = vsyncpa [#allocation4], 0
    // Predicated region
    $region2: #{tpu_custom_call.1} parent=1 // pred_check
      _
    $region3: #{tpu_custom_call.1} parent=1 // pred_check_branch
      %10 = sbr.rel (0) target = $region5
    $region4: #{tpu_custom_call.1} parent=1 // pred_region
      %12 = vsyncadd [#allocation3], 0
      %s14 = sshll.u32 %s0, 4
      %s15 = int_to_ptr.hbm [resolvable:$true] %s14
      %s16 = sshll.u32 [#allocation2], 4
      %s17 = int_to_ptr.vmem [resolvable:$true] %s16
      %19 = dma.hbm_to_vmem [thread:$0]  %s15, 256, %s17, [#allocation3]
    $region5: #{tpu_custom_call.1} parent=1 // pred_fallthru
      _
    // Predicated region
    $region6: #{tpu_custom_call.1} parent=1 // pred_check
      _
    $region7: #{tpu_custom_call.1} parent=1 // pred_check_branch
      %21 = sbr.rel (0) target = $region9
    $region8: #{tpu_custom_call.1} parent=1 // pred_region
      _
    $region9: #{tpu_custom_call.1} parent=1 // pred_fallthru
      _
    // Predicated region
    $region10: #{tpu_custom_call.1} parent=1 // pred_check
      _
    $region11: #{tpu_custom_call.1} parent=1 // pred_check_branch
      %23 = sbr.rel (0) target = $region13
    $region12: #{tpu_custom_call.1} parent=1 // pred_region
      %25 = dma.done [#allocation3], 256
    $region13: #{tpu_custom_call.1} parent=1 // pred_fallthru
      _
    %v26 = vld [vmem:[#allocation2] sm:$0xff]
    %v27 = vld [vmem:[#allocation2 + $0x8] sm:$0xff]
    %v28 = vld [vmem:[%s1] sm:$0xff]
    %30 = vset.pattern.permute.xlu0 0
    %31 = vperm.xlu0 %30, %v28
    %v32 = vpop.permute.xlu0 %31
    %v34 = vmul.f32 %v26, %v32
    %v35 = vmul.f32 %v27, %v32
    %36 = vset.pattern.permute.xlu0 1
    %37 = vperm.xlu0 %36, %v28
    %v38 = vpop.permute.xlu0 %37
    %v40 = vadd.f32 %v34, %v38
    %v41 = vadd.f32 %v35, %v38
    %42 = vst [vmem:[#allocation5] sm:$0xff] %v40
    %43 = vst [vmem:[#allocation5 + $0x8] sm:$0xff] %v41
    // Predicated region
    $region14: #{tpu_custom_call.1} parent=1 // pred_check
      _
    $region15: #{tpu_custom_call.1} parent=1 // pred_check_branch
      %45 = sbr.rel (0) target = $region17
    $region16: #{tpu_custom_call.1} parent=1 // pred_region
      %47 = vsyncadd [#allocation4], 0
      %s49 = sshll.u32 [#allocation5], 4
      %s50 = int_to_ptr.vmem [resolvable:$true] %s49
      %s51 = sshll.u32 %s2, 4
      %s52 = int_to_ptr.hbm [resolvable:$true] %s51
      %54 = dma.vmem_to_hbm [thread:$0]  %s50, 256, %s52, [#allocation4]
    $region17: #{tpu_custom_call.1} parent=1 // pred_fallthru
      _
    // Predicated region
    $region18: #{tpu_custom_call.1} parent=1 // pred_check
      _
    $region19: #{tpu_custom_call.1} parent=1 // pred_check_branch
      %56 = sbr.rel (0) target = $region21
    $region20: #{tpu_custom_call.1} parent=1 // pred_region
      %58 = dma.done [#allocation4], 256
    $region21: #{tpu_custom_call.1} parent=1 // pred_fallthru
      _
    %59 = vsyncpa [#allocation3], 1
    %60 = vsyncpa [#allocation4], 1

</llo_original>
